<compile_context>
chip_gen: v5e
topology: v5e:2x2
jax: 0.10.0
libtpu: 0.0.40
codegen_flags: <defaults>
</compile_context>

<pallas_src>
import functools

import jax
import jax.numpy as jnp
from jax.experimental import pallas as pl
from jax.experimental.pallas import tpu as pltpu


def _ceil_to(a: int, b: int) -> int:
    return (a + b - 1) // b * b


def _vmem_budget_bytes() -> int:
    """Per-generation scoped-VMEM budget (v7x: 64 MiB/TC physical, v5e/v6e: 128 MiB)."""
    phys = 64 * 1024 * 1024  # conservative default = v7x per-TensorCore
    try:
        phys = int(pltpu.get_tpu_info().vmem_capacity_bytes)
    except Exception:
        pass
    # leave ~25% headroom for compiler scratch; never ask for more than 96 MiB
    return min(96 * 1024 * 1024, (phys * 3) // 4)


def sage_kernel(a_ref, xwl_ref, skip_ref, invd_ref, o_ref, *, tk, xwl_resident):
    """Grid = (row_tiles, k_tiles); k (last axis) is the reduction axis.

    a_ref:    [tm, tk]        bf16  exact 0/1 adjacency tile (streamed)
    xwl_ref:  [tk, Dp] or [NPc, Dp]  bf16  (x @ Wl); resident full block when it fits
    skip_ref: [tm, Dp]        f32   x @ Wr + (bl + br), resident across k
    invd_ref: [tm, 1]         f32   1 / max(in_degree, 1), resident across k
    o_ref:    [tm, Dp]        f32   output tile; doubles as the accumulator
    """
    k = pl.program_id(1)

    @pl.when(k == 0)
    def _():
        o_ref[...] = jnp.zeros_like(o_ref)

    if xwl_resident:
        start = pl.multiple_of(k * tk, tk)
        xwl = xwl_ref[pl.ds(start, tk), :]
    else:
        xwl = xwl_ref[...]

    o_ref[...] += jnp.dot(a_ref[...], xwl, preferred_element_type=jnp.float32)

    @pl.when(k == pl.num_programs(1) - 1)
    def _():
        # mean = (sum over neighbors) * inv_deg, then skip path and ReLU
        o_ref[...] = jnp.maximum(o_ref[...] * invd_ref[...] + skip_ref[...], 0.0)


def sage_layer_forward(x, edge_index, w_l, b_l, w_r, b_r, *, tm=1024, tk=2048):
    """x: [N, D_in] f32, edge_index: [2, E] int32.

    Weights are stored [D_in, D_out] (transposed vs. torch.nn.Linear.weight),
    biases are [D_out].
    """
    N, d_in = x.shape
    d_out = w_l.shape[1]

    # ---- tile / padding planning ------------------------------------------------
    Dp = _ceil_to(d_out, 128)              # lane-dense feature dim (do NOT pad to 256:
                                           # kernel is HBM-bound, extra lanes = pure traffic)
    tm = min(tm, _ceil_to(N, 128))
    tk = min(tk, _ceil_to(N, 128))
    # keep >= 8 row tiles when possible so the "parallel" axis feeds both v7x TCs
    while tm > 256 and -(-N // tm) < 8:
        tm //= 2
    # avoid gross column padding waste for mid-size graphs
    while tk > 512 and (_ceil_to(N, tk) - N) * 4 > N:
        tk //= 2

    NPr = _ceil_to(N, tm)                  # padded rows (destinations)
    NPc = _ceil_to(N, tk)                  # padded cols (neighbors) -- decoupled

    # ---- VMEM budgeting & (x@Wl) residency decision ------------------------------
    vmem_budget = _vmem_budget_bytes()
    bytes_base = (2 * tm * tk * 2          # A tile (bf16, double-buffered)
                  + 2 * tm * Dp * 4        # skip block
                  + 2 * tm * Dp * 4        # output block
                  + 2 * tm * 128 * 4)      # inv_deg block (lane-padded estimate)
    bytes_xwl_resident = 2 * NPc * Dp * 2
    xwl_resident = bytes_base + bytes_xwl_resident + (4 << 20) <= vmem_budget

    xf = x.astype(jnp.float32)

    # ---- glue (plain JAX): exact 0/1 adjacency (bf16, built directly) ------------
    row, col = edge_index[0], edge_index[1]
    adj = jnp.zeros((NPr, NPc), jnp.bfloat16).at[row, col].add(
        jnp.ones(row.shape, jnp.bfloat16))
    deg = jnp.zeros((NPr,), jnp.float32).at[row].add(1.0)
    inv_deg = (1.0 / jnp.maximum(deg, 1.0)).reshape(NPr, 1)   # f32, applied in-kernel

    # ---- glue: fused tiny projection  xw = x @ [Wl | Wr],  b = bl + br -----------
    w_fused = jnp.concatenate([w_l, w_r], axis=1).astype(jnp.float32)   # [D_in, 2*D_out]
    xw = xf @ w_fused                                                   # [N, 2*D_out]
    xwl = xw[:, :d_out]                                                 # aggregated path
    skip = xw[:, d_out:] + (b_l + b_r).astype(jnp.float32)[None, :]     # x@Wr + bl + br

    # pad to TPU-friendly shapes; streamed k-operand in bf16 (f32 accumulation on MXU)
    xwl_p = jnp.zeros((NPc, Dp), jnp.bfloat16).at[:N, :d_out].set(xwl.astype(jnp.bfloat16))
    skip_p = jnp.zeros((NPr, Dp), jnp.float32).at[:N, :d_out].set(skip)

    if xwl_resident:
        xwl_spec = pl.BlockSpec((NPc, Dp), lambda i, k: (0, 0))   # DMA'd exactly once
    else:
        xwl_spec = pl.BlockSpec((tk, Dp), lambda i, k: (k, 0))    # streamed along k

    kernel = functools.partial(sage_kernel, tk=tk, xwl_resident=xwl_resident)

    out_p = pl.pallas_call(
        kernel,
        out_shape=jax.ShapeDtypeStruct((NPr, Dp), jnp.float32),
        grid_spec=pltpu.PrefetchScalarGridSpec(
            num_scalar_prefetch=0,
            grid=(NPr // tm, NPc // tk),
            in_specs=[
                pl.BlockSpec((tm, tk), lambda i, k: (i, k)),   # A tile (bf16, streamed)
                xwl_spec,                                      # (x@Wl) resident or streamed
                pl.BlockSpec((tm, Dp), lambda i, k: (i, 0)),   # skip (f32, resident over k)
                pl.BlockSpec((tm, 1), lambda i, k: (i, 0)),    # inv_deg (f32, resident)
            ],
            out_specs=pl.BlockSpec((tm, Dp), lambda i, k: (i, 0)),
        ),
        compiler_params=pltpu.CompilerParams(
            dimension_semantics=("parallel", "arbitrary"),
            vmem_limit_bytes=vmem_budget,
        ),
    )(adj, xwl_p, skip_p, inv_deg)

    return out_p[:N, :d_out]


def _reference(x, edge_index, w_l, b_l, w_r, b_r):
    # pure-JAX f32 reference of the PyTorch forward (norm='None' path)
    N = x.shape[0]
    row, col = edge_index[0], edge_index[1]
    x_j = x[col]
    summed = jnp.zeros((N, x.shape[1]), jnp.float32).at[row].add(x_j)
    cnt = jnp.zeros((N,), jnp.float32).at[row].add(1.0)
    agg = summed / jnp.maximum(cnt, 1.0)[:, None]
    out = agg @ w_l + b_l + x @ w_r + b_r
    return jnp.maximum(out, 0.0)


if __name__ == "__main__":
    N, E = 64, 256            # nodes, edges
    in_dim, out_dim = 32, 32

    key = jax.random.PRNGKey(0)
    kx, ke1, ke2, kwl, kwr, kbl, kbr = jax.random.split(key, 7)

    x = jax.random.normal(kx, (N, in_dim), dtype=jnp.float32)
    row = jax.random.randint(ke1, (E,), 0, N, dtype=jnp.int32)
    col = jax.random.randint(ke2, (E,), 0, N, dtype=jnp.int32)
    edge_index = jnp.stack([row, col], axis=0)

    # glorot-uniform weights; small nonzero biases to exercise the bias-fold path
    s = (6.0 / (in_dim + out_dim)) ** 0.5
    w_l = jax.random.uniform(kwl, (in_dim, out_dim), jnp.float32, -s, s)
    w_r = jax.random.uniform(kwr, (in_dim, out_dim), jnp.float32, -s, s)
    b_l = jax.random.uniform(kbl, (out_dim,), jnp.float32, -0.1, 0.1)
    b_r = jax.random.uniform(kbr, (out_dim,), jnp.float32, -0.1, 0.1)

    out = sage_layer_forward(x, edge_index, w_l, b_l, w_r, b_r)
    out = jax.block_until_ready(out)

    ref = _reference(x, edge_index, w_l, b_l, w_r, b_r)
    # adjacency and inv_deg are exact now; only (x@Wl) is bf16 on the MXU (f32 acc)
    assert out.shape == ref.shape
    assert jnp.allclose(out, ref, atol=2e-2, rtol=2e-2), (
        f"mismatch vs reference, max abs diff = {jnp.max(jnp.abs(out - ref))}")

    print("KERNEL_OK")
</pallas_src>

<mosaic_0001>
module attributes {stable_mosaic.version = 11 : i64} {
  func.func @sage_kernel(%arg0: i32, %arg1: i32, %arg2: memref<128x128xbf16, #tpu.memory_space<vmem>>, %arg3: memref<128x128xbf16, #tpu.memory_space<vmem>>, %arg4: memref<128x128xf32, #tpu.memory_space<vmem>>, %arg5: memref<128x1xf32, #tpu.memory_space<vmem>>, %arg6: memref<128x128xf32, #tpu.memory_space<vmem>>) attributes {dimension_semantics = [#tpu.dimension_semantics<parallel>, #tpu.dimension_semantics<arbitrary>], iteration_bounds = array<i64: 1, 1>, scalar_prefetch = 0 : i64, scratch_operands = 0 : i64, tpu.core_type = #tpu.core_type<tc>, window_params = [{transform_indices = @transform_0, window_bounds = array<i64: 128, 128>}, {pipeline_mode = #tpu.pipeline_mode<synchronous>, transform_indices = @transform_1, window_bounds = array<i64: 128, 128>}, {transform_indices = @transform_2, window_bounds = array<i64: 128, 128>}, {transform_indices = @transform_3, window_bounds = array<i64: 128, 1>}, {transform_indices = @transform_4, window_bounds = array<i64: 128, 128>}]} {
    %c0_i32 = arith.constant 0 : i32
    %0 = arith.cmpi eq, %arg1, %c0_i32 : i32
    %1 = arith.extui %0 : i1 to i32
    %c0_i32_0 = arith.constant 0 : i32
    %2 = arith.cmpi ne, %1, %c0_i32_0 : i32
    scf.if %2 {
      %cst_9 = arith.constant 0.000000e+00 : f32
      %15 = vector.broadcast %cst_9 : f32 to vector<128x128xf32>
      %c0_10 = arith.constant 0 : index
      %c0_11 = arith.constant 0 : index
      %16 = vector.load %arg6[%c0_10, %c0_11] : memref<128x128xf32, #tpu.memory_space<vmem>>, vector<128x128xf32>
      tpu.vector_store %arg6[%c0_10, %c0_11], %15 {strides = array<i32>} : memref<128x128xf32, #tpu.memory_space<vmem>>, vector<128x128xf32>,
    } else {
    }
    %c128_i32 = arith.constant 128 : i32
    %3 = arith.muli %arg1, %c128_i32 : i32
    %4 = tpu.assume_multiple %3, 128 : i32
    %5 = arith.index_cast %4 : i32 to index
    %c0 = arith.constant 0 : index
    %6 = vector.load %arg3[%5, %c0] : memref<128x128xbf16, #tpu.memory_space<vmem>>, vector<128x128xbf16>
    %c0_1 = arith.constant 0 : index
    %c0_2 = arith.constant 0 : index
    %7 = vector.load %arg6[%c0_1, %c0_2] : memref<128x128xf32, #tpu.memory_space<vmem>>, vector<128x128xf32>
    %c0_3 = arith.constant 0 : index
    %c0_4 = arith.constant 0 : index
    %8 = vector.load %arg2[%c0_3, %c0_4] : memref<128x128xbf16, #tpu.memory_space<vmem>>, vector<128x128xbf16>
    %cst = arith.constant dense<0.000000e+00> : vector<128x128xf32>
    %9 = tpu.matmul %8, %6, %cst {dimension_numbers = #tpu.dot_dimension_numbers<[1], [0], [0], [1], [0, 0, 1, 1], [], []>} : vector<128x128xbf16>, vector<128x128xbf16>, vector<128x128xf32> -> vector<128x128xf32>
    %10 = arith.addf %7, %9 : vector<128x128xf32>
    %c0_5 = arith.constant 0 : index
    %c0_6 = arith.constant 0 : index
    %11 = vector.load %arg6[%c0_5, %c0_6] : memref<128x128xf32, #tpu.memory_space<vmem>>, vector<128x128xf32>
    tpu.vector_store %arg6[%c0_5, %c0_6], %10 {strides = array<i32>} : memref<128x128xf32, #tpu.memory_space<vmem>>, vector<128x128xf32>,
    %c0_i32_7 = arith.constant 0 : i32
    %12 = arith.cmpi eq, %arg1, %c0_i32_7 : i32
    %13 = arith.extui %12 : i1 to i32
    %c0_i32_8 = arith.constant 0 : i32
    %14 = arith.cmpi ne, %13, %c0_i32_8 : i32
    scf.if %14 {
      %c0_9 = arith.constant 0 : index
      %c0_10 = arith.constant 0 : index
      %15 = vector.load %arg6[%c0_9, %c0_10] : memref<128x128xf32, #tpu.memory_space<vmem>>, vector<128x128xf32>
      %c0_11 = arith.constant 0 : index
      %c0_12 = arith.constant 0 : index
      %16 = vector.load %arg5[%c0_11, %c0_12] : memref<128x1xf32, #tpu.memory_space<vmem>>, vector<128x1xf32>
      %17 = vector.broadcast %16 : vector<128x1xf32> to vector<128x128xf32>
      %18 = arith.mulf %15, %17 : vector<128x128xf32>
      %c0_13 = arith.constant 0 : index
      %c0_14 = arith.constant 0 : index
      %19 = vector.load %arg4[%c0_13, %c0_14] : memref<128x128xf32, #tpu.memory_space<vmem>>, vector<128x128xf32>
      %20 = arith.addf %18, %19 : vector<128x128xf32>
      %cst_15 = arith.constant 0.000000e+00 : f32
      %21 = vector.broadcast %cst_15 : f32 to vector<128x128xf32>
      %22 = arith.maximumf %20, %21 : vector<128x128xf32>
      %c0_16 = arith.constant 0 : index
      %c0_17 = arith.constant 0 : index
      %23 = vector.load %arg6[%c0_16, %c0_17] : memref<128x128xf32, #tpu.memory_space<vmem>>, vector<128x128xf32>
      tpu.vector_store %arg6[%c0_16, %c0_17], %22 {strides = array<i32>} : memref<128x128xf32, #tpu.memory_space<vmem>>, vector<128x128xf32>,
    } else {
    }
    return
  }
  func.func @transform_0(%arg0: i32, %arg1: i32) -> (i32, i32) {
    %c0_i32 = arith.constant 0 : i32
    return %arg0, %arg1 : i32, i32
  }
  func.func @transform_1(%arg0: i32, %arg1: i32) -> (i32, i32) {
    %c0_i32 = arith.constant 0 : i32
    %c0_i32_0 = arith.constant 0 : i32
    %c0_i32_1 = arith.constant 0 : i32
    return %c0_i32, %c0_i32_0 : i32, i32
  }
  func.func @transform_2(%arg0: i32, %arg1: i32) -> (i32, i32) {
    %c0_i32 = arith.constant 0 : i32
    %c0_i32_0 = arith.constant 0 : i32
    return %arg0, %c0_i32 : i32, i32
  }
  func.func @transform_3(%arg0: i32, %arg1: i32) -> (i32, i32) {
    %c0_i32 = arith.constant 0 : i32
    %c0_i32_0 = arith.constant 0 : i32
    return %arg0, %c0_i32 : i32, i32
  }
  func.func @transform_4(%arg0: i32, %arg1: i32) -> (i32, i32) {
    %c0_i32 = arith.constant 0 : i32
    %c0_i32_0 = arith.constant 0 : i32
    return %arg0, %c0_i32 : i32, i32
  }
}

</mosaic_0001>

<llo_original>
// kernel: tpu_custom_call.1
$region0: #{tpu_custom_call.1}
  #allocation0 [shape = 'u32[]', space=smem, size = 0x4, offset = 0x4, fixed_abs, tag = 'smem constant byte address 0x4 - core index']
  #allocation1 [shape = 'u32[72,128]{1,0:T(1,128)}', space=vmem, size = 0x9000, scoped, tag = 'internal scratch']
  %s0 = inlined_call_operand.hbm [shape: bf16[128,128], index: 0, kind: input, shape index: {}]
  %s1 = inlined_call_operand.hbm [shape: bf16[128,128], index: 1, kind: input, shape index: {}]
  %s2 = inlined_call_operand.vmem [shape: f32[128,128], index: 2, kind: input, shape index: {}]
  %s3 = inlined_call_operand.vmem [shape: f32[128,1], index: 3, kind: input, shape index: {}]
  %s4 = inlined_call_operand.hbm [shape: f32[128,128], index: 4, kind: output, shape index: {}]
  %s5 = sld [smem:[#allocation0]]
  $region42: #{tpu_custom_call.1} parent=0
    _
  %s7 = ssub.s32 1, %s5
  %s8 = scalar_select 0, %s7, %s5
  $region1: #{tpu_custom_call.1} parent=0
    #allocation2 [shape = 'u8[32768]{0}', space=vmem, size = 0x8000, scoped, tag = 'input window, operand 0, single buffered']
    #allocation3 [shape = 's32[1]{0}', space=sflag, size = 0x4, scoped, tag = 'scoped memory for tpu_custom_call.1']
    #allocation4 [shape = 's32[1]{0}', space=sflag, size = 0x4, scoped, tag = 'scoped memory for tpu_custom_call.1']
    #allocation5 [shape = 'u8[32768]{0}', space=vmem, size = 0x8000, scoped, tag = 'input window, operand 1, single buffered']
    #allocation6 [shape = 's32[1]{0}', space=sflag, size = 0x4, scoped, tag = 'scoped memory for tpu_custom_call.1']
    #allocation7 [shape = 'u8[65536]{0}', space=vmem, size = 0x10000, scoped, tag = 'output window, operand 0, single buffered']
    %9 = vsyncpa [#allocation3], 0
    %10 = vsyncpa [#allocation6], 0
    %11 = vsyncpa [#allocation4], 0
    // Predicated region
    $region2: #{tpu_custom_call.1} parent=1 // pred_check
      _
    $region3: #{tpu_custom_call.1} parent=1 // pred_check_branch
      %13 = sbr.rel (0) target = $region5
    $region4: #{tpu_custom_call.1} parent=1 // pred_region
      %15 = vsyncadd [#allocation3], 0
      %s16 = sshll.u32 %s0, 4
      %s17 = int_to_ptr.hbm [resolvable:$true] %s16
      %s18 = sshll.u32 [#allocation2], 4
      %s19 = int_to_ptr.vmem [resolvable:$true] %s18
      %24 = dma.hbm_to_vmem [thread:$0]  %s17, 1024, %s19, [#allocation3], 64, 64, 4
    $region5: #{tpu_custom_call.1} parent=1 // pred_fallthru
      _
    // Predicated region
    $region6: #{tpu_custom_call.1} parent=1 // pred_check
      _
    $region7: #{tpu_custom_call.1} parent=1 // pred_check_branch
      %26 = sbr.rel (0) target = $region9
    $region8: #{tpu_custom_call.1} parent=1 // pred_region
      %28 = vsyncadd [#allocation6], 0
      %s29 = sshll.u32 %s1, 4
      %s30 = int_to_ptr.hbm [resolvable:$true] %s29
      %s31 = sshll.u32 [#allocation5], 4
      %s32 = int_to_ptr.vmem [resolvable:$true] %s31
      %37 = dma.hbm_to_vmem [thread:$0]  %s30, 1024, %s32, [#allocation6], 64, 64, 4
    $region9: #{tpu_custom_call.1} parent=1 // pred_fallthru
      _
    // Predicated region
    $region10: #{tpu_custom_call.1} parent=1 // pred_check
      _
    $region11: #{tpu_custom_call.1} parent=1 // pred_check_branch
      %39 = sbr.rel (0) target = $region13
    $region12: #{tpu_custom_call.1} parent=1 // pred_region
      _
    $region13: #{tpu_custom_call.1} parent=1 // pred_fallthru
      _
    // Predicated region
    $region14: #{tpu_custom_call.1} parent=1 // pred_check
      _
    $region15: #{tpu_custom_call.1} parent=1 // pred_check_branch
      %41 = sbr.rel (0) target = $region17
    $region16: #{tpu_custom_call.1} parent=1 // pred_region
      _
    $region17: #{tpu_custom_call.1} parent=1 // pred_fallthru
      _
    // Predicated region
    $region18: #{tpu_custom_call.1} parent=1 // pred_check
      _
    $region19: #{tpu_custom_call.1} parent=1 // pred_check_branch
      %43 = sbr.rel (0) target = $region21
    $region20: #{tpu_custom_call.1} parent=1 // pred_region
      %45 = dma.done [#allocation3], 1024
    $region21: #{tpu_custom_call.1} parent=1 // pred_fallthru
      _
    // Predicated region
    $region22: #{tpu_custom_call.1} parent=1 // pred_check
      _
    $region23: #{tpu_custom_call.1} parent=1 // pred_check_branch
      %47 = sbr.rel (0) target = $region25
    $region24: #{tpu_custom_call.1} parent=1 // pred_region
      %49 = dma.done [#allocation6], 1024
    $region25: #{tpu_custom_call.1} parent=1 // pred_fallthru
      _
    %p50 = scmp.eq.s32.totalorder 0, 0
    // Predicated region
    $region26: #{tpu_custom_call.1} parent=1 // pred_check
      %p51 = pneg %p50
    $region27: #{tpu_custom_call.1} parent=1 // pred_check_branch
      %53 = sbr.rel (%p51) target = $region29
    $region28: #{tpu_custom_call.1} parent=1 // pred_region
      %54 = vst [vmem:[#allocation7] sm:$0xff] 0.0
      %55 = vst [vmem:[#allocation7 + $0x8] sm:$0xff] 0.0
      %56 = vst [vmem:[#allocation7 + $0x10] sm:$0xff] 0.0
      %57 = vst [vmem:[#allocation7 + $0x18] sm:$0xff] 0.0
      %58 = vst [vmem:[#allocation7 + $0x20] sm:$0xff] 0.0
      %59 = vst [vmem:[#allocation7 + $0x28] sm:$0xff] 0.0
      %60 = vst [vmem:[#allocation7 + $0x30] sm:$0xff] 0.0
      %61 = vst [vmem:[#allocation7 + $0x38] sm:$0xff] 0.0
      %62 = vst [vmem:[#allocation7 + $0x40] sm:$0xff] 0.0
      %63 = vst [vmem:[#allocation7 + $0x48] sm:$0xff] 0.0
      %64 = vst [vmem:[#allocation7 + $0x50] sm:$0xff] 0.0
      %65 = vst [vmem:[#allocation7 + $0x58] sm:$0xff] 0.0
      %66 = vst [vmem:[#allocation7 + $0x60] sm:$0xff] 0.0
      %67 = vst [vmem:[#allocation7 + $0x68] sm:$0xff] 0.0
      %68 = vst [vmem:[#allocation7 + $0x70] sm:$0xff] 0.0
      %69 = vst [vmem:[#allocation7 + $0x78] sm:$0xff] 0.0
    $region29: #{tpu_custom_call.1} parent=1 // pred_fallthru
      _
    %s70 = smul.u32 0, 128
    %s71 = sshra.s32 %s70, 3
    %s72 = sand.u32 %s70, 7
    %s73 = smul.addr %s71, 4
    %s74 = scalar_lea.vmem [#allocation5], %s73
    %v75 = vld [vmem:[%s74] sm:$0xf]
    %v76 = vld [vmem:[%s74 + $0x4] sm:$0xf]
    %v77 = vld [vmem:[%s74 + $0x8] sm:$0xf]
    %v78 = vld [vmem:[%s74 + $0xc] sm:$0xf]
    %v79 = vld [vmem:[%s74 + $0x10] sm:$0xf]
    %v80 = vld [vmem:[%s74 + $0x14] sm:$0xf]
    %v81 = vld [vmem:[%s74 + $0x18] sm:$0xf]
    %v82 = vld [vmem:[%s74 + $0x1c] sm:$0xf]
    %v83 = vld [vmem:[%s74 + $0x20] sm:$0xf]
    %v84 = vld [vmem:[%s74 + $0x24] sm:$0xf]
    %v85 = vld [vmem:[%s74 + $0x28] sm:$0xf]
    %v86 = vld [vmem:[%s74 + $0x2c] sm:$0xf]
    %v87 = vld [vmem:[%s74 + $0x30] sm:$0xf]
    %v88 = vld [vmem:[%s74 + $0x34] sm:$0xf]
    %v89 = vld [vmem:[%s74 + $0x38] sm:$0xf]
    %v90 = vld [vmem:[%s74 + $0x3c] sm:$0xf]
    %v91 = vld [vmem:[#allocation7] sm:$0xff]
    %v92 = vld [vmem:[#allocation7 + $0x8] sm:$0xff]
    %v93 = vld [vmem:[#allocation7 + $0x10] sm:$0xff]
    %v94 = vld [vmem:[#allocation7 + $0x18] sm:$0xff]
    %v95 = vld [vmem:[#allocation7 + $0x20] sm:$0xff]
    %v96 = vld [vmem:[#allocation7 + $0x28] sm:$0xff]
    %v97 = vld [vmem:[#allocation7 + $0x30] sm:$0xff]
    %v98 = vld [vmem:[#allocation7 + $0x38] sm:$0xff]
    %v99 = vld [vmem:[#allocation7 + $0x40] sm:$0xff]
    %v100 = vld [vmem:[#allocation7 + $0x48] sm:$0xff]
    %v101 = vld [vmem:[#allocation7 + $0x50] sm:$0xff]
    %v102 = vld [vmem:[#allocation7 + $0x58] sm:$0xff]
    %v103 = vld [vmem:[#allocation7 + $0x60] sm:$0xff]
    %v104 = vld [vmem:[#allocation7 + $0x68] sm:$0xff]
    %v105 = vld [vmem:[#allocation7 + $0x70] sm:$0xff]
    %v106 = vld [vmem:[#allocation7 + $0x78] sm:$0xff]
    %v107 = vld [vmem:[#allocation2] sm:$0xf]
    %v108 = vld [vmem:[#allocation2 + $0x4] sm:$0xf]
    %v109 = vld [vmem:[#allocation2 + $0x8] sm:$0xf]
    %v110 = vld [vmem:[#allocation2 + $0xc] sm:$0xf]
    %v111 = vld [vmem:[#allocation2 + $0x10] sm:$0xf]
    %v112 = vld [vmem:[#allocation2 + $0x14] sm:$0xf]
    %v113 = vld [vmem:[#allocation2 + $0x18] sm:$0xf]
    %v114 = vld [vmem:[#allocation2 + $0x1c] sm:$0xf]
    %v115 = vld [vmem:[#allocation2 + $0x20] sm:$0xf]
    %v116 = vld [vmem:[#allocation2 + $0x24] sm:$0xf]
    %v117 = vld [vmem:[#allocation2 + $0x28] sm:$0xf]
    %v118 = vld [vmem:[#allocation2 + $0x2c] sm:$0xf]
    %v119 = vld [vmem:[#allocation2 + $0x30] sm:$0xf]
    %v120 = vld [vmem:[#allocation2 + $0x34] sm:$0xf]
    %v121 = vld [vmem:[#allocation2 + $0x38] sm:$0xf]
    %v122 = vld [vmem:[#allocation2 + $0x3c] sm:$0xf]
    %v139 = vunpack.c.l.b16 %v107
    %v140 = vunpack.c.l.b16 %v108
    %v141 = vunpack.c.l.b16 %v109
    %v142 = vunpack.c.l.b16 %v110
    %v143 = vunpack.c.l.b16 %v111
    %v144 = vunpack.c.l.b16 %v112
    %v145 = vunpack.c.l.b16 %v113
    %v146 = vunpack.c.l.b16 %v114
    %v147 = vunpack.c.l.b16 %v115
    %v148 = vunpack.c.l.b16 %v116
    %v149 = vunpack.c.l.b16 %v117
    %v150 = vunpack.c.l.b16 %v118
    %v151 = vunpack.c.l.b16 %v119
    %v152 = vunpack.c.l.b16 %v120
    %v153 = vunpack.c.l.b16 %v121
    %v154 = vunpack.c.l.b16 %v122
    %v155 = vpack.c.b16 %v140, %v139
    %v156 = vpack.c.b16 %v142, %v141
    %v157 = vpack.c.b16 %v144, %v143
    %v158 = vpack.c.b16 %v146, %v145
    %v159 = vpack.c.b16 %v148, %v147
    %v160 = vpack.c.b16 %v150, %v149
    %v161 = vpack.c.b16 %v152, %v151
    %v162 = vpack.c.b16 %v154, %v153
    %v187 = vunpack.c.l.b16 %v75
    %v188 = vunpack.c.l.b16 %v76
    %v189 = vunpack.c.l.b16 %v77
    %v190 = vunpack.c.l.b16 %v78
    %v191 = vunpack.c.l.b16 %v79
    %v192 = vunpack.c.l.b16 %v80
    %v193 = vunpack.c.l.b16 %v81
    %v194 = vunpack.c.l.b16 %v82
    %v195 = vunpack.c.l.b16 %v83
    %v196 = vunpack.c.l.b16 %v84
    %v197 = vunpack.c.l.b16 %v85
    %v198 = vunpack.c.l.b16 %v86
    %v199 = vunpack.c.l.b16 %v87
    %v200 = vunpack.c.l.b16 %v88
    %v201 = vunpack.c.l.b16 %v89
    %v202 = vunpack.c.l.b16 %v90
    %v203 = vpack.c.b16 %v188, %v187
    %v204 = vpack.c.b16 %v190, %v189
    %v205 = vpack.c.b16 %v192, %v191
    %v206 = vpack.c.b16 %v194, %v193
    %v207 = vpack.c.b16 %v196, %v195
    %v208 = vpack.c.b16 %v198, %v197
    %v209 = vpack.c.b16 %v200, %v199
    %v210 = vpack.c.b16 %v202, %v201
    %219 = vmatpush.bf16.msra.mxu0 %v210
    %220 = vmatpush.bf16.msra.mxu0 %v209
    %221 = vmatpush.bf16.msra.mxu0 %v208
    %222 = vmatpush.bf16.msra.mxu0 %v207
    %223 = vmatpush.bf16.msra.mxu0 %v206
    %224 = vmatpush.bf16.msra.mxu0 %v205
    %225 = vmatpush.bf16.msra.mxu0 %v204
    %226 = vmatpush.bf16.msra.mxu0 %v203
    %227 = vmatmul.bf16.gmra.mxu0 %v155
    %v228 = vpop.f32.mrf.mxu0
    %v229 = vadd.f32 0.0, %v228
    %v230 = vpop.f32.mrf.mxu0
    %v231 = vadd.f32 0.0, %v230
    %232 = vmatmul.bf16.gmra.mxu0 %v156
    %v233 = vpop.f32.mrf.mxu0
    %v234 = vadd.f32 0.0, %v233
    %v235 = vpop.f32.mrf.mxu0
    %v236 = vadd.f32 0.0, %v235
    %237 = vmatmul.bf16.gmra.mxu0 %v157
    %v238 = vpop.f32.mrf.mxu0
    %v239 = vadd.f32 0.0, %v238
    %v240 = vpop.f32.mrf.mxu0
    %v241 = vadd.f32 0.0, %v240
    %242 = vmatmul.bf16.gmra.mxu0 %v158
    %v243 = vpop.f32.mrf.mxu0
    %v244 = vadd.f32 0.0, %v243
    %v245 = vpop.f32.mrf.mxu0
    %v246 = vadd.f32 0.0, %v245
    %247 = vmatmul.bf16.gmra.mxu0 %v159
    %v248 = vpop.f32.mrf.mxu0
    %v249 = vadd.f32 0.0, %v248
    %v250 = vpop.f32.mrf.mxu0
    %v251 = vadd.f32 0.0, %v250
    %252 = vmatmul.bf16.gmra.mxu0 %v160
    %v253 = vpop.f32.mrf.mxu0
    %v254 = vadd.f32 0.0, %v253
    %v255 = vpop.f32.mrf.mxu0
    %v256 = vadd.f32 0.0, %v255
    %257 = vmatmul.bf16.gmra.mxu0 %v161
    %v258 = vpop.f32.mrf.mxu0
    %v259 = vadd.f32 0.0, %v258
    %v260 = vpop.f32.mrf.mxu0
    %v261 = vadd.f32 0.0, %v260
    %262 = vmatmul.bf16.gmra.mxu0 %v162
    %v263 = vpop.f32.mrf.mxu0
    %v264 = vadd.f32 0.0, %v263
    %v265 = vpop.f32.mrf.mxu0
    %v266 = vadd.f32 0.0, %v265
    %267 = vdwg.mxu0
    %v268 = vadd.f32 %v91, %v229
    %v269 = vadd.f32 %v92, %v231
    %v270 = vadd.f32 %v93, %v234
    %v271 = vadd.f32 %v94, %v236
    %v272 = vadd.f32 %v95, %v239
    %v273 = vadd.f32 %v96, %v241
    %v274 = vadd.f32 %v97, %v244
    %v275 = vadd.f32 %v98, %v246
    %v276 = vadd.f32 %v99, %v249
    %v277 = vadd.f32 %v100, %v251
    %v278 = vadd.f32 %v101, %v254
    %v279 = vadd.f32 %v102, %v256
    %v280 = vadd.f32 %v103, %v259
    %v281 = vadd.f32 %v104, %v261
    %v282 = vadd.f32 %v105, %v264
    %v283 = vadd.f32 %v106, %v266
    %284 = vst [vmem:[#allocation7] sm:$0xff] %v268
    %285 = vst [vmem:[#allocation7 + $0x8] sm:$0xff] %v269
    %286 = vst [vmem:[#allocation7 + $0x10] sm:$0xff] %v270
    %287 = vst [vmem:[#allocation7 + $0x18] sm:$0xff] %v271
    %288 = vst [vmem:[#allocation7 + $0x20] sm:$0xff] %v272
    %289 = vst [vmem:[#allocation7 + $0x28] sm:$0xff] %v273
    %290 = vst [vmem:[#allocation7 + $0x30] sm:$0xff] %v274
    %291 = vst [vmem:[#allocation7 + $0x38] sm:$0xff] %v275
    %292 = vst [vmem:[#allocation7 + $0x40] sm:$0xff] %v276
    %293 = vst [vmem:[#allocation7 + $0x48] sm:$0xff] %v277
    %294 = vst [vmem:[#allocation7 + $0x50] sm:$0xff] %v278
    %295 = vst [vmem:[#allocation7 + $0x58] sm:$0xff] %v279
    %296 = vst [vmem:[#allocation7 + $0x60] sm:$0xff] %v280
    %297 = vst [vmem:[#allocation7 + $0x68] sm:$0xff] %v281
    %298 = vst [vmem:[#allocation7 + $0x70] sm:$0xff] %v282
    %299 = vst [vmem:[#allocation7 + $0x78] sm:$0xff] %v283
    // Predicated region
    $region30: #{tpu_custom_call.1} parent=1 // pred_check
      %p300 = pneg %p50
    $region31: #{tpu_custom_call.1} parent=1 // pred_check_branch
      %302 = sbr.rel (%p300) target = $region33
    $region32: #{tpu_custom_call.1} parent=1 // pred_region
      %v303 = vld [vmem:[#allocation7] sm:$0xff]
      %v304 = vld [vmem:[#allocation7 + $0x8] sm:$0xff]
      %v305 = vld [vmem:[#allocation7 + $0x10] sm:$0xff]
      %v306 = vld [vmem:[#allocation7 + $0x18] sm:$0xff]
      %v307 = vld [vmem:[#allocation7 + $0x20] sm:$0xff]
      %v308 = vld [vmem:[#allocation7 + $0x28] sm:$0xff]
      %v309 = vld [vmem:[#allocation7 + $0x30] sm:$0xff]
      %v310 = vld [vmem:[#allocation7 + $0x38] sm:$0xff]
      %v311 = vld [vmem:[#allocation7 + $0x40] sm:$0xff]
      %v312 = vld [vmem:[#allocation7 + $0x48] sm:$0xff]
      %v313 = vld [vmem:[#allocation7 + $0x50] sm:$0xff]
      %v314 = vld [vmem:[#allocation7 + $0x58] sm:$0xff]
      %v315 = vld [vmem:[#allocation7 + $0x60] sm:$0xff]
      %v316 = vld [vmem:[#allocation7 + $0x68] sm:$0xff]
      %v317 = vld [vmem:[#allocation7 + $0x70] sm:$0xff]
      %v318 = vld [vmem:[#allocation7 + $0x78] sm:$0xff]
      %v319 = vld [vmem:[%s3] sm:$0xff]
      %v320 = vld [vmem:[%s3 + $0x8] sm:$0xff]
      %v321 = vld [vmem:[%s3 + $0x10] sm:$0xff]
      %v322 = vld [vmem:[%s3 + $0x18] sm:$0xff]
      %v323 = vld [vmem:[%s3 + $0x20] sm:$0xff]
      %v324 = vld [vmem:[%s3 + $0x28] sm:$0xff]
      %v325 = vld [vmem:[%s3 + $0x30] sm:$0xff]
      %v326 = vld [vmem:[%s3 + $0x38] sm:$0xff]
      %v327 = vld [vmem:[%s3 + $0x40] sm:$0xff]
      %v328 = vld [vmem:[%s3 + $0x48] sm:$0xff]
      %v329 = vld [vmem:[%s3 + $0x50] sm:$0xff]
      %v330 = vld [vmem:[%s3 + $0x58] sm:$0xff]
      %v331 = vld [vmem:[%s3 + $0x60] sm:$0xff]
      %v332 = vld [vmem:[%s3 + $0x68] sm:$0xff]
      %v333 = vld [vmem:[%s3 + $0x70] sm:$0xff]
      %v334 = vld [vmem:[%s3 + $0x78] sm:$0xff]
      %336 = vset.pattern.permute.xlu0 0
      %337 = vperm.xlu0 %336, %v319
      %v338 = vpop.permute.xlu0 %337
      %341 = vset.pattern.permute.xlu0 0
      %342 = vperm.xlu0 %341, %v320
      %v343 = vpop.permute.xlu0 %342
      %346 = vset.pattern.permute.xlu0 0
      %347 = vperm.xlu0 %346, %v321
      %v348 = vpop.permute.xlu0 %347
      %351 = vset.pattern.permute.xlu0 0
      %352 = vperm.xlu0 %351, %v322
      %v353 = vpop.permute.xlu0 %352
      %356 = vset.pattern.permute.xlu0 0
      %357 = vperm.xlu0 %356, %v323
      %v358 = vpop.permute.xlu0 %357
      %361 = vset.pattern.permute.xlu0 0
      %362 = vperm.xlu0 %361, %v324
      %v363 = vpop.permute.xlu0 %362
      %366 = vset.pattern.permute.xlu0 0
      %367 = vperm.xlu0 %366, %v325
      %v368 = vpop.permute.xlu0 %367
      %371 = vset.pattern.permute.xlu0 0
      %372 = vperm.xlu0 %371, %v326
      %v373 = vpop.permute.xlu0 %372
      %376 = vset.pattern.permute.xlu0 0
      %377 = vperm.xlu0 %376, %v327
      %v378 = vpop.permute.xlu0 %377
      %381 = vset.pattern.permute.xlu0 0
      %382 = vperm.xlu0 %381, %v328
      %v383 = vpop.permute.xlu0 %382
      %386 = vset.pattern.permute.xlu0 0
      %387 = vperm.xlu0 %386, %v329
      %v388 = vpop.permute.xlu0 %387
      %391 = vset.pattern.permute.xlu0 0
      %392 = vperm.xlu0 %391, %v330
      %v393 = vpop.permute.xlu0 %392
      %396 = vset.pattern.permute.xlu0 0
      %397 = vperm.xlu0 %396, %v331
      %v398 = vpop.permute.xlu0 %397
      %401 = vset.pattern.permute.xlu0 0
      %402 = vperm.xlu0 %401, %v332
      %v403 = vpop.permute.xlu0 %402
      %406 = vset.pattern.permute.xlu0 0
      %407 = vperm.xlu0 %406, %v333
      %v408 = vpop.permute.xlu0 %407
      %411 = vset.pattern.permute.xlu0 0
      %412 = vperm.xlu0 %411, %v334
      %v413 = vpop.permute.xlu0 %412
      %v415 = vmul.f32 %v303, %v338
      %v416 = vmul.f32 %v304, %v343
      %v417 = vmul.f32 %v305, %v348
      %v418 = vmul.f32 %v306, %v353
      %v419 = vmul.f32 %v307, %v358
      %v420 = vmul.f32 %v308, %v363
      %v421 = vmul.f32 %v309, %v368
      %v422 = vmul.f32 %v310, %v373
      %v423 = vmul.f32 %v311, %v378
      %v424 = vmul.f32 %v312, %v383
      %v425 = vmul.f32 %v313, %v388
      %v426 = vmul.f32 %v314, %v393
      %v427 = vmul.f32 %v315, %v398
      %v428 = vmul.f32 %v316, %v403
      %v429 = vmul.f32 %v317, %v408
      %v430 = vmul.f32 %v318, %v413
      %v431 = vld [vmem:[%s2] sm:$0xff]
      %v432 = vld [vmem:[%s2 + $0x8] sm:$0xff]
      %v433 = vld [vmem:[%s2 + $0x10] sm:$0xff]
      %v434 = vld [vmem:[%s2 + $0x18] sm:$0xff]
      %v435 = vld [vmem:[%s2 + $0x20] sm:$0xff]
      %v436 = vld [vmem:[%s2 + $0x28] sm:$0xff]
      %v437 = vld [vmem:[%s2 + $0x30] sm:$0xff]
      %v438 = vld [vmem:[%s2 + $0x38] sm:$0xff]
      %v439 = vld [vmem:[%s2 + $0x40] sm:$0xff]
      %v440 = vld [vmem:[%s2 + $0x48] sm:$0xff]
      %v441 = vld [vmem:[%s2 + $0x50] sm:$0xff]
      %v442 = vld [vmem:[%s2 + $0x58] sm:$0xff]
      %v443 = vld [vmem:[%s2 + $0x60] sm:$0xff]
      %v444 = vld [vmem:[%s2 + $0x68] sm:$0xff]
      %v445 = vld [vmem:[%s2 + $0x70] sm:$0xff]
      %v446 = vld [vmem:[%s2 + $0x78] sm:$0xff]
      %v447 = vadd.f32 %v415, %v431
      %v448 = vadd.f32 %v416, %v432
      %v449 = vadd.f32 %v417, %v433
      %v450 = vadd.f32 %v418, %v434
      %v451 = vadd.f32 %v419, %v435
      %v452 = vadd.f32 %v420, %v436
      %v453 = vadd.f32 %v421, %v437
      %v454 = vadd.f32 %v422, %v438
      %v455 = vadd.f32 %v423, %v439
      %v456 = vadd.f32 %v424, %v440
      %v457 = vadd.f32 %v425, %v441
      %v458 = vadd.f32 %v426, %v442
      %v459 = vadd.f32 %v427, %v443
      %v460 = vadd.f32 %v428, %v444
      %v461 = vadd.f32 %v429, %v445
      %v462 = vadd.f32 %v430, %v446
      %v463 = vmax.f32 %v447, 0.0
      %v464 = vmax.f32 %v448, 0.0
      %v465 = vmax.f32 %v449, 0.0
      %v466 = vmax.f32 %v450, 0.0
      %v467 = vmax.f32 %v451, 0.0
      %v468 = vmax.f32 %v452, 0.0
      %v469 = vmax.f32 %v453, 0.0
      %v470 = vmax.f32 %v454, 0.0
      %v471 = vmax.f32 %v455, 0.0
      %v472 = vmax.f32 %v456, 0.0
      %v473 = vmax.f32 %v457, 0.0
      %v474 = vmax.f32 %v458, 0.0
      %v475 = vmax.f32 %v459, 0.0
      %v476 = vmax.f32 %v460, 0.0
      %v477 = vmax.f32 %v461, 0.0
      %v478 = vmax.f32 %v462, 0.0
      %479 = vst [vmem:[#allocation7] sm:$0xff] %v463
      %480 = vst [vmem:[#allocation7 + $0x8] sm:$0xff] %v464
      %481 = vst [vmem:[#allocation7 + $0x10] sm:$0xff] %v465
      %482 = vst [vmem:[#allocation7 + $0x18] sm:$0xff] %v466
      %483 = vst [vmem:[#allocation7 + $0x20] sm:$0xff] %v467
      %484 = vst [vmem:[#allocation7 + $0x28] sm:$0xff] %v468
      %485 = vst [vmem:[#allocation7 + $0x30] sm:$0xff] %v469
      %486 = vst [vmem:[#allocation7 + $0x38] sm:$0xff] %v470
      %487 = vst [vmem:[#allocation7 + $0x40] sm:$0xff] %v471
      %488 = vst [vmem:[#allocation7 + $0x48] sm:$0xff] %v472
      %489 = vst [vmem:[#allocation7 + $0x50] sm:$0xff] %v473
      %490 = vst [vmem:[#allocation7 + $0x58] sm:$0xff] %v474
      %491 = vst [vmem:[#allocation7 + $0x60] sm:$0xff] %v475
      %492 = vst [vmem:[#allocation7 + $0x68] sm:$0xff] %v476
      %493 = vst [vmem:[#allocation7 + $0x70] sm:$0xff] %v477
      %494 = vst [vmem:[#allocation7 + $0x78] sm:$0xff] %v478
    $region33: #{tpu_custom_call.1} parent=1 // pred_fallthru
      _
    // Predicated region
    $region34: #{tpu_custom_call.1} parent=1 // pred_check
      _
    $region35: #{tpu_custom_call.1} parent=1 // pred_check_branch
      %496 = sbr.rel (0) target = $region37
    $region36: #{tpu_custom_call.1} parent=1 // pred_region
      %498 = vsyncadd [#allocation4], 0
      %s499 = sshll.u32 [#allocation7], 4
      %s500 = int_to_ptr.vmem [resolvable:$true] %s499
      %s501 = sshll.u32 %s4, 4
      %s502 = int_to_ptr.hbm [resolvable:$true] %s501
      %507 = dma.vmem_to_hbm [thread:$0]  %s500, 2048, %s502, [#allocation4], 128, 128, 8
    $region37: #{tpu_custom_call.1} parent=1 // pred_fallthru
      _
    // Predicated region
    $region38: #{tpu_custom_call.1} parent=1 // pred_check
      _
    $region39: #{tpu_custom_call.1} parent=1 // pred_check_branch
      %509 = sbr.rel (0) target = $region41
    $region40: #{tpu_custom_call.1} parent=1 // pred_region
      %511 = dma.done [#allocation4], 2048
    $region41: #{tpu_custom_call.1} parent=1 // pred_fallthru
      _
    %512 = vsyncpa [#allocation3], 1
    %513 = vsyncpa [#allocation6], 1
    %514 = vsyncpa [#allocation4], 1

</llo_original>
